<compile_context>
chip_gen: v5e
topology: v5e:2x2
jax: 0.10.0
libtpu: 0.0.40
codegen_flags: <defaults>
</compile_context>

<pallas_src>
import jax
import jax.numpy as jnp
from jax.experimental import pallas as pl
from jax.experimental.pallas import tpu as pltpu


LANE = 128       # full vreg lane width -> unmasked vst
TILE_R = 1024    # rows per block: 1024 * 128 * 4B = 512 KiB per f32 block
                 # (double-buffered in + out ~ 2 MiB: fits v5e/v6e/v7x scoped VMEM)


def _encoder_identity_kernel(x_ref, o_ref):
    # Elementwise pass-through on the VPU (full-lane, unmasked stores).
    o_ref[...] = x_ref[...]


def encoder_forward(var: jax.Array) -> jax.Array:
    """Pallas implementation of Encoder.forward(var) (identity placeholder)."""
    orig_shape = var.shape
    total = var.size
    itemsize = jnp.dtype(var.dtype).itemsize

    # Lane-dense layout: flatten and view as (rows, 128).
    flat = var.reshape(-1)
    pad = (-total) % LANE
    if pad:
        flat = jnp.pad(flat, (0, pad))
    rows = flat.size // LANE
    x2d = flat.reshape(rows, LANE)

    # Block shape: (tile_r, 128).  Either tile_r == rows (full-dim exemption
    # from the (8,128) rule) or tile_r == TILE_R (multiple of 8).  Overhanging
    # last blocks are handled by Pallas with masked writes.
    tile_r = rows if rows <= TILE_R else TILE_R
    num_blocks = pl.cdiv(rows, tile_r)

    out2d = pl.pallas_call(
        _encoder_identity_kernel,
        out_shape=jax.ShapeDtypeStruct(x2d.shape, x2d.dtype),
        grid=(num_blocks,),
        in_specs=[pl.BlockSpec((tile_r, LANE), lambda i: (i, 0))],
        out_specs=pl.BlockSpec((tile_r, LANE), lambda i: (i, 0)),
        compiler_params=pltpu.CompilerParams(
            # Independent row-tiles: shard across TensorCores on v7x megacore.
            dimension_semantics=("parallel",),
        ),
        cost_estimate=pl.CostEstimate(
            flops=0,
            transcendentals=0,
            bytes_accessed=2 * x2d.size * itemsize,
        ),
    )(x2d)

    out_flat = out2d.reshape(-1)
    if pad:
        out_flat = out_flat[:total]
    return out_flat.reshape(orig_shape)


if __name__ == "__main__":
    key = jax.random.PRNGKey(0)
    # Small NCHW input consistent with a conv-style encoder signature.
    x = jax.random.normal(key, (2, 4, 16, 16), dtype=jnp.float32)

    y = encoder_forward(x)
    jax.block_until_ready(y)

    # Correctness check against the only well-defined semantics (identity).
    assert y.shape == x.shape and y.dtype == x.dtype
    assert bool(jnp.allclose(y, x))

    print("KERNEL_OK")
</pallas_src>

<mosaic_0001>
module attributes {stable_mosaic.version = 11 : i64} {
  func.func @_encoder_identity_kernel(%arg0: i32, %arg1: memref<16x128xf32, #tpu.memory_space<vmem>>, %arg2: memref<16x128xf32, #tpu.memory_space<vmem>>) attributes {dimension_semantics = [#tpu.dimension_semantics<parallel>], iteration_bounds = array<i64: 1>, scalar_prefetch = 0 : i64, scratch_operands = 0 : i64, tpu.core_type = #tpu.core_type<tc>, window_params = [{transform_indices = @transform_0, window_bounds = array<i64: 16, 128>}, {transform_indices = @transform_1, window_bounds = array<i64: 16, 128>}]} {
    %c0 = arith.constant 0 : index
    %c0_0 = arith.constant 0 : index
    %0 = vector.load %arg1[%c0, %c0_0] : memref<16x128xf32, #tpu.memory_space<vmem>>, vector<16x128xf32>
    %c0_1 = arith.constant 0 : index
    %c0_2 = arith.constant 0 : index
    %1 = vector.load %arg2[%c0_1, %c0_2] : memref<16x128xf32, #tpu.memory_space<vmem>>, vector<16x128xf32>
    tpu.vector_store %arg2[%c0_1, %c0_2], %0 {strides = array<i32>} : memref<16x128xf32, #tpu.memory_space<vmem>>, vector<16x128xf32>,
    return
  }
  func.func @transform_0(%arg0: i32) -> (i32, i32) {
    %c0_i32 = arith.constant 0 : i32
    %c0_i32_0 = arith.constant 0 : i32
    return %arg0, %c0_i32 : i32, i32
  }
  func.func @transform_1(%arg0: i32) -> (i32, i32) {
    %c0_i32 = arith.constant 0 : i32
    %c0_i32_0 = arith.constant 0 : i32
    return %arg0, %c0_i32 : i32, i32
  }
}

</mosaic_0001>

<llo_original>
// kernel: tpu_custom_call.1
$region0: #{tpu_custom_call.1}
  #allocation0 [shape = 'u32[]', space=smem, size = 0x4, offset = 0x4, fixed_abs, tag = 'smem constant byte address 0x4 - core index']
  #allocation1 [shape = 'u32[72,128]{1,0:T(1,128)}', space=vmem, size = 0x9000, scoped, tag = 'internal scratch']
  %s0 = inlined_call_operand.hbm [shape: f32[16,128], index: 0, kind: input, shape index: {}]
  %s1 = inlined_call_operand.hbm [shape: f32[16,128], index: 1, kind: output, shape index: {}]
  %s2 = sld [smem:[#allocation0]]
  $region18: #{tpu_custom_call.1} parent=0
    _
  %s4 = ssub.s32 1, %s2
  %s5 = scalar_select 0, %s4, %s2
  $region1: #{tpu_custom_call.1} parent=0
    #allocation2 [shape = 'u8[8192]{0}', space=vmem, size = 0x2000, scoped, tag = 'input window, operand 0, single buffered']
    #allocation3 [shape = 's32[1]{0}', space=sflag, size = 0x4, scoped, tag = 'scoped memory for tpu_custom_call.1']
    #allocation4 [shape = 's32[1]{0}', space=sflag, size = 0x4, scoped, tag = 'scoped memory for tpu_custom_call.1']
    #allocation5 [shape = 'u8[8192]{0}', space=vmem, size = 0x2000, scoped, tag = 'output window, operand 0, single buffered']
    %6 = vsyncpa [#allocation3], 0
    %7 = vsyncpa [#allocation4], 0
    // Predicated region
    $region2: #{tpu_custom_call.1} parent=1 // pred_check
      _
    $region3: #{tpu_custom_call.1} parent=1 // pred_check_branch
      %9 = sbr.rel (0) target = $region5
    $region4: #{tpu_custom_call.1} parent=1 // pred_region
      %11 = vsyncadd [#allocation3], 0
      %s12 = sshll.u32 %s0, 4
      %s13 = int_to_ptr.hbm [resolvable:$true] %s12
      %s14 = sshll.u32 [#allocation2], 4
      %s15 = int_to_ptr.vmem [resolvable:$true] %s14
      %20 = dma.hbm_to_vmem [thread:$0]  %s13, 256, %s15, [#allocation3], 128, 128, 8
    $region5: #{tpu_custom_call.1} parent=1 // pred_fallthru
      _
    // Predicated region
    $region6: #{tpu_custom_call.1} parent=1 // pred_check
      _
    $region7: #{tpu_custom_call.1} parent=1 // pred_check_branch
      %22 = sbr.rel (0) target = $region9
    $region8: #{tpu_custom_call.1} parent=1 // pred_region
      %24 = dma.done [#allocation3], 256
    $region9: #{tpu_custom_call.1} parent=1 // pred_fallthru
      _
    %v25 = vld [vmem:[#allocation2] sm:$0xff]
    %v26 = vld [vmem:[#allocation2 + $0x8] sm:$0xff]
    %27 = vst [vmem:[#allocation5] sm:$0xff] %v25
    %28 = vst [vmem:[#allocation5 + $0x8] sm:$0xff] %v26
    // Predicated region
    $region10: #{tpu_custom_call.1} parent=1 // pred_check
      _
    $region11: #{tpu_custom_call.1} parent=1 // pred_check_branch
      %30 = sbr.rel (0) target = $region13
    $region12: #{tpu_custom_call.1} parent=1 // pred_region
      %32 = vsyncadd [#allocation4], 0
      %s33 = sshll.u32 [#allocation5], 4
      %s34 = int_to_ptr.vmem [resolvable:$true] %s33
      %s35 = sshll.u32 %s1, 4
      %s36 = int_to_ptr.hbm [resolvable:$true] %s35
      %41 = dma.vmem_to_hbm [thread:$0]  %s34, 256, %s36, [#allocation4], 128, 128, 8
    $region13: #{tpu_custom_call.1} parent=1 // pred_fallthru
      _
    // Predicated region
    $region14: #{tpu_custom_call.1} parent=1 // pred_check
      _
    $region15: #{tpu_custom_call.1} parent=1 // pred_check_branch
      %43 = sbr.rel (0) target = $region17
    $region16: #{tpu_custom_call.1} parent=1 // pred_region
      %45 = dma.done [#allocation4], 256
    $region17: #{tpu_custom_call.1} parent=1 // pred_fallthru
      _
    %46 = vsyncpa [#allocation3], 1
    %47 = vsyncpa [#allocation4], 1

</llo_original>
